<compile_context>
chip_gen: v6e
topology: v6e:2x2x1
jax: 0.10.0
libtpu: 0.0.40
codegen_flags: <defaults>
</compile_context>

<pallas_src>
import functools

import numpy as np

import jax
import jax.numpy as jnp
from jax.experimental import pallas as pl
from jax.experimental.pallas import tpu as pltpu


# --------------------------------------------------------------------------- #
# Helpers
# --------------------------------------------------------------------------- #
def _round_up(x, m):
    return (x + m - 1) // m * m


def _cdiv(a, b):
    return (a + b - 1) // b


def _vmem_capacity_bytes():
    """Physical VMEM of the local TPU; default to 128 MiB if unqueryable."""
    try:
        cap = int(pltpu.get_tpu_info().vmem_capacity_bytes)
        if cap > 0:
            return cap
    except Exception:
        pass
    return 128 * 1024 * 1024


def _sublane_multiple(itemsize):
    # Packed-sublane tile height: f32 -> 8, bf16 -> 16, int8/fp8 -> 32.
    return 8 * max(1, 4 // max(1, itemsize))


def _resident_block_spec(block_shape, index_map):
    """BlockSpec for a grid-invariant operand, single-buffered when supported."""
    try:
        return pl.BlockSpec(block_shape, index_map, pipeline_mode=pl.Buffered(1))
    except (AttributeError, TypeError):
        return pl.BlockSpec(block_shape, index_map)


def _window_count_matrix(seq_len, kernel_size, padded_len, transpose):
    """Banded window-count matrix of the edge-replicated moving average.

    w[s, t] = number of times source position s is tapped by the AvgPool1d
    window (with replication padding) centred on output position t; dividing
    the matvec result by kernel_size reproduces series_decomp's moving mean
    exactly.  Counts are small integers -> exactly representable in bf16 and
    f32, so the 1/kernel_size scale is applied *after* the matmul on the f32
    accumulator.  Rows/cols >= seq_len are zero so time padding is inert.
    """
    pad = (kernel_size - 1) // 2
    t = np.arange(seq_len)[None, :]                 # output positions (1, L)
    j = np.arange(kernel_size)[:, None]             # window taps      (K, 1)
    src = np.clip(t - pad + j, 0, seq_len - 1)      # clamped source   (K, L)
    w = np.zeros((padded_len, padded_len), np.float32)
    np.add.at(w, (src, np.broadcast_to(t, src.shape)), 1.0)
    return w.T if transpose else w


# --------------------------------------------------------------------------- #
# Kernels
# --------------------------------------------------------------------------- #
def _decomp_channels_kernel(x_ref, wt_ref, res_ref, mean_ref, *, scale, bblk):
    """Native-layout path: x tile (bblk, L, Cblk); wt (L, L) window counts.

    Channels live on lanes, the time axis is the matmul contraction (sublane)
    axis.  Outputs keep the input layout, so no wrapper transposes are needed.
    """
    wt = wt_ref[...]
    for i in range(bblk):                            # small, statically unrolled
        x = x_ref[i]                                 # (L, Cblk), input dtype
        # bf16 inputs: native bf16 x bf16 -> f32 MXU pass (counts are exact in
        # bf16).  f32 inputs: Mosaic's default multi-pass f32 matmul
        # (validated to 1e-5 against the reference).
        mean = jnp.dot(wt, x, preferred_element_type=jnp.float32) * scale
        mean = mean.astype(mean_ref.dtype)
        mean_ref[i] = mean
        res_ref[i] = x - mean                        # res + mean == x exactly


def _decomp_rows_kernel(x_ref, w_ref, res_ref, mean_ref, *, scale):
    """Fallback path: x tile (rt, Lp) with time on lanes; w (Lp, Lp) counts."""
    x = x_ref[...]
    mean = jnp.dot(x, w_ref[...], preferred_element_type=jnp.float32) * scale
    mean = mean.astype(mean_ref.dtype)
    mean_ref[...] = mean
    res_ref[...] = x - mean


# --------------------------------------------------------------------------- #
# Native (B, L, C) layout path — channels on lanes (C >= 32)
# --------------------------------------------------------------------------- #
def _pick_native_tiles(b, l, c, itemsize, target_bytes, min_steps,
                       vmem_ceiling, w_bytes):
    """Pick (batch block, channel block) for the native-layout grid."""
    if c % 128 == 0:
        c_opts = [blk for blk in range(128, c + 1, 128) if c % blk == 0]
    else:
        c_opts = [c]          # full-channel block (legal: equals the full dim)
    b_opts = [d for d in range(1, b + 1) if b % d == 0]

    max_steps = b * (c // min(c_opts))
    want_steps = min(min_steps, max_steps)

    best = None
    for cblk in c_opts:
        for bblk in b_opts:
            tile = bblk * l * cblk * itemsize
            # input + 2 outputs double-buffered, W single-buffered, f32 temps.
            need = 6 * tile + w_bytes + 2 * l * cblk * 4 + (2 << 20)
            steps = (b // bblk) * (c // cblk)
            score = (need <= vmem_ceiling,            # must fit under the cap
                     min(steps, want_steps),          # keep the pipeline busy
                     tile <= 2 * target_bytes,        # don't blow past target
                     -abs(tile - target_bytes))       # then: closest to target
            if best is None or score > best[0]:
                best = (score, bblk, cblk)
    return best[1], best[2]


def _series_decomp_channels_on_lanes(x, kernel_size, scale, target_bytes,
                                     min_steps, vmem_ceiling):
    b, l, c = x.shape
    dtype = x.dtype
    itemsize = jnp.dtype(dtype).itemsize

    wt = jnp.asarray(_window_count_matrix(l, kernel_size, l, transpose=True),
                     dtype=dtype)
    w_bytes = l * l * itemsize

    bblk, cblk = _pick_native_tiles(b, l, c, itemsize, target_bytes, min_steps,
                                    vmem_ceiling, w_bytes)
    grid = (b // bblk, c // cblk)

    tile = bblk * l * cblk * itemsize
    need = 6 * tile + w_bytes + 2 * l * cblk * 4 + (2 << 20)
    vmem_limit = int(min(vmem_ceiling, max(32 << 20, need)))

    kernel = functools.partial(_decomp_channels_kernel, scale=scale, bblk=bblk)
    res, mean = pl.pallas_call(
        kernel,
        grid=grid,
        in_specs=[
            pl.BlockSpec((bblk, l, cblk), lambda i, j: (i, 0, j)),
            _resident_block_spec((l, l), lambda i, j: (0, 0)),
        ],
        out_specs=(
            pl.BlockSpec((bblk, l, cblk), lambda i, j: (i, 0, j)),
            pl.BlockSpec((bblk, l, cblk), lambda i, j: (i, 0, j)),
        ),
        out_shape=(
            jax.ShapeDtypeStruct((b, l, c), dtype),
            jax.ShapeDtypeStruct((b, l, c), dtype),
        ),
        compiler_params=pltpu.CompilerParams(
            dimension_semantics=("parallel", "parallel"),
            vmem_limit_bytes=vmem_limit,
        ),
    )(x, wt)
    return res, mean


# --------------------------------------------------------------------------- #
# Fallback path — time on lanes, (batch*channel) rows on sublanes (tiny C)
# --------------------------------------------------------------------------- #
def _pick_row_block(rows, lp, itemsize, target_bytes, min_steps, sub):
    if rows <= sub:
        return rows
    rt = max(sub, min(rows, target_bytes // max(1, lp * itemsize)))
    rt = max(sub, (rt // sub) * sub)
    while rt > sub and _cdiv(rows, rt) < min_steps:   # keep the pipeline fed
        rt -= sub
    return rt


def _series_decomp_time_on_lanes(x, kernel_size, scale, target_bytes,
                                 min_steps, vmem_ceiling):
    b, l, c = x.shape
    dtype = x.dtype
    itemsize = jnp.dtype(dtype).itemsize

    lp = _round_up(l, 128)                      # time on lanes, lane-dense
    xt = jnp.transpose(x, (0, 2, 1))            # (B, C, L)
    if lp != l:
        xt = jnp.pad(xt, ((0, 0), (0, 0), (0, lp - l)))
    rows = b * c
    x2 = xt.reshape(rows, lp)

    sub = _sublane_multiple(itemsize)
    rt = _pick_row_block(rows, lp, itemsize, target_bytes, min_steps, sub)
    rows_p = _round_up(rows, rt)
    if rows_p != rows:                          # keep every block full
        x2 = jnp.pad(x2, ((0, rows_p - rows), (0, 0)))
    grid = (rows_p // rt,)

    w = jnp.asarray(_window_count_matrix(l, kernel_size, lp, transpose=False),
                    dtype=dtype)

    tile = rt * lp * itemsize
    need = 6 * tile + lp * lp * itemsize + 2 * rt * lp * 4 + (2 << 20)
    vmem_limit = int(min(vmem_ceiling, max(32 << 20, need)))

    kernel = functools.partial(_decomp_rows_kernel, scale=scale)
    res2, mean2 = pl.pallas_call(
        kernel,
        grid=grid,
        in_specs=[
            pl.BlockSpec((rt, lp), lambda i: (i, 0)),
            _resident_block_spec((lp, lp), lambda i: (0, 0)),
        ],
        out_specs=(
            pl.BlockSpec((rt, lp), lambda i: (i, 0)),
            pl.BlockSpec((rt, lp), lambda i: (i, 0)),
        ),
        out_shape=(
            jax.ShapeDtypeStruct((rows_p, lp), dtype),
            jax.ShapeDtypeStruct((rows_p, lp), dtype),
        ),
        compiler_params=pltpu.CompilerParams(
            dimension_semantics=("parallel",),
            vmem_limit_bytes=vmem_limit,
        ),
    )(x2, w)

    def _unfold(y2):
        return jnp.transpose(y2[:rows].reshape(b, c, lp)[:, :, :l], (0, 2, 1))

    return _unfold(res2), _unfold(mean2)


# --------------------------------------------------------------------------- #
# Public entry point
# --------------------------------------------------------------------------- #
def series_decomp(x, kernel_size):
    """Pallas series decomposition.

    Args:
      x: (B, L, C) array (f32 or bf16).
      kernel_size: odd moving-average window (Autoformer default is 25).
    Returns:
      (res, moving_mean), both (B, L, C) in x's dtype, with res + mean == x.
    """
    assert kernel_size % 2 == 1, "series_decomp assumes an odd kernel_size"
    b, l, c = x.shape
    scale = 1.0 / float(kernel_size)

    cap = _vmem_capacity_bytes()
    vmem_ceiling = (cap * 4) // 5                     # ~20% compiler headroom
    target_bytes = (2 << 20) if cap <= (96 << 20) else (6 << 20)
    min_steps = 8                                     # >= ~4 steps per v7x TC

    if c >= 32:
        # Native layout: no wrapper transposes/padding -> no extra HBM passes.
        return _series_decomp_channels_on_lanes(
            x, kernel_size, scale, target_bytes, min_steps, vmem_ceiling)
    # Tiny channel counts: fold (B, C) onto sublanes, time on lanes.
    return _series_decomp_time_on_lanes(
        x, kernel_size, scale, target_bytes, min_steps, vmem_ceiling)


# --------------------------------------------------------------------------- #
# Reference + validation
# --------------------------------------------------------------------------- #
def _reference_series_decomp(x, kernel_size):
    """Pure-JAX reference mirroring the PyTorch module (for validation)."""
    pad = (kernel_size - 1) // 2
    front = jnp.repeat(x[:, 0:1, :], pad, axis=1)
    end = jnp.repeat(x[:, -1:, :], pad, axis=1)
    xp = jnp.concatenate([front, x, end], axis=1)
    windows = jnp.stack(
        [xp[:, d:d + x.shape[1], :] for d in range(kernel_size)], axis=0
    )
    mean = jnp.mean(windows, axis=0)
    return x - mean, mean


if __name__ == "__main__":
    key = jax.random.PRNGKey(0)

    # (B, L, C, kernel_size) — f32 cases at 1e-5 tolerance.
    f32_checks = [
        (2, 16, 8, 5),      # tiny C  -> time-on-lanes fallback path
        (2, 48, 7, 25),     # odd tiny C, Autoformer default window
        (2, 48, 128, 25),   # native (B, L, C) path, C multiple of 128
        (4, 48, 96, 25),    # native path, C not a multiple of 128 (full-C block)
    ]
    for idx, (B, L, C, K) in enumerate(f32_checks):
        k = jax.random.fold_in(key, idx)
        x = jax.random.normal(k, (B, L, C), dtype=jnp.float32)

        res, mean = series_decomp(x, K)
        res = jax.block_until_ready(res)
        mean = jax.block_until_ready(mean)

        res_ref, mean_ref = _reference_series_decomp(x, K)
        assert jnp.allclose(mean, mean_ref, atol=1e-5, rtol=1e-5), ("mean", B, L, C, K)
        assert jnp.allclose(res, res_ref, atol=1e-5, rtol=1e-5), ("res", B, L, C, K)

    # bf16 fast path (native bf16 x bf16 -> f32 matmul, post-scaled).
    bf16_checks = [
        (16, 32, 128, 9),   # native path, batched (bblk > 1) tiles
        (2, 48, 8, 25),     # fallback path in bf16 (packed-sublane row tiles)
    ]
    for idx, (B, L, C, K) in enumerate(bf16_checks):
        k = jax.random.fold_in(key, 100 + idx)
        x = jax.random.normal(k, (B, L, C), dtype=jnp.float32).astype(jnp.bfloat16)

        res, mean = series_decomp(x, K)
        res = jax.block_until_ready(res)
        mean = jax.block_until_ready(mean)

        res_ref, mean_ref = _reference_series_decomp(x.astype(jnp.float32), K)
        assert jnp.allclose(mean.astype(jnp.float32), mean_ref,
                            atol=2e-2, rtol=2e-2), ("mean-bf16", B, L, C, K)
        assert jnp.allclose(res.astype(jnp.float32), res_ref,
                            atol=2e-2, rtol=2e-2), ("res-bf16", B, L, C, K)

    print("KERNEL_OK")
</pallas_src>

<mosaic_0001>
module attributes {stable_mosaic.version = 11 : i64} {
  func.func @_decomp_rows_kernel(%arg0: i32, %arg1: memref<8x128xf32, #tpu.memory_space<vmem>>, %arg2: memref<128x128xf32, #tpu.memory_space<vmem>>, %arg3: memref<8x128xf32, #tpu.memory_space<vmem>>, %arg4: memref<8x128xf32, #tpu.memory_space<vmem>>) attributes {dimension_semantics = [#tpu.dimension_semantics<parallel>], iteration_bounds = array<i64: 2>, scalar_prefetch = 0 : i64, scratch_operands = 0 : i64, tpu.core_type = #tpu.core_type<tc>, window_params = [{transform_indices = @transform_0, window_bounds = array<i64: 8, 128>}, {pipeline_mode = #tpu.pipeline_mode<synchronous>, transform_indices = @transform_1, window_bounds = array<i64: 128, 128>}, {transform_indices = @transform_2, window_bounds = array<i64: 8, 128>}, {transform_indices = @transform_3, window_bounds = array<i64: 8, 128>}]} {
    %c0 = arith.constant 0 : index
    %c0_0 = arith.constant 0 : index
    %0 = vector.load %arg1[%c0, %c0_0] : memref<8x128xf32, #tpu.memory_space<vmem>>, vector<8x128xf32>
    %c0_1 = arith.constant 0 : index
    %c0_2 = arith.constant 0 : index
    %1 = vector.load %arg2[%c0_1, %c0_2] : memref<128x128xf32, #tpu.memory_space<vmem>>, vector<128x128xf32>
    %cst = arith.constant dense<0.000000e+00> : vector<8x128xf32>
    %2 = tpu.matmul %0, %1, %cst {dimension_numbers = #tpu.dot_dimension_numbers<[1], [0], [0], [1], [0, 0, 1, 1], [], []>} : vector<8x128xf32>, vector<128x128xf32>, vector<8x128xf32> -> vector<8x128xf32>
    %cst_3 = arith.constant 2.000000e-01 : f32
    %3 = vector.broadcast %cst_3 : f32 to vector<8x128xf32>
    %4 = arith.mulf %2, %3 : vector<8x128xf32>
    %c0_4 = arith.constant 0 : index
    %c0_5 = arith.constant 0 : index
    %5 = vector.load %arg4[%c0_4, %c0_5] : memref<8x128xf32, #tpu.memory_space<vmem>>, vector<8x128xf32>
    tpu.vector_store %arg4[%c0_4, %c0_5], %4 {strides = array<i32>} : memref<8x128xf32, #tpu.memory_space<vmem>>, vector<8x128xf32>,
    %6 = arith.subf %0, %4 : vector<8x128xf32>
    %c0_6 = arith.constant 0 : index
    %c0_7 = arith.constant 0 : index
    %7 = vector.load %arg3[%c0_6, %c0_7] : memref<8x128xf32, #tpu.memory_space<vmem>>, vector<8x128xf32>
    tpu.vector_store %arg3[%c0_6, %c0_7], %6 {strides = array<i32>} : memref<8x128xf32, #tpu.memory_space<vmem>>, vector<8x128xf32>,
    return
  }
  func.func @transform_0(%arg0: i32) -> (i32, i32) {
    %c0_i32 = arith.constant 0 : i32
    %c0_i32_0 = arith.constant 0 : i32
    return %arg0, %c0_i32 : i32, i32
  }
  func.func @transform_1(%arg0: i32) -> (i32, i32) {
    %c0_i32 = arith.constant 0 : i32
    %c0_i32_0 = arith.constant 0 : i32
    %c0_i32_1 = arith.constant 0 : i32
    return %c0_i32, %c0_i32_0 : i32, i32
  }
  func.func @transform_2(%arg0: i32) -> (i32, i32) {
    %c0_i32 = arith.constant 0 : i32
    %c0_i32_0 = arith.constant 0 : i32
    return %arg0, %c0_i32 : i32, i32
  }
  func.func @transform_3(%arg0: i32) -> (i32, i32) {
    %c0_i32 = arith.constant 0 : i32
    %c0_i32_0 = arith.constant 0 : i32
    return %arg0, %c0_i32 : i32, i32
  }
}

</mosaic_0001>

<llo_original>
// kernel: tpu_custom_call.1
$region0: #{tpu_custom_call.1}
  #allocation0 [shape = 'u32[]', space=smem, size = 0x4, offset = 0x4, fixed_abs, tag = 'smem constant byte address 0x4 - core index']
  #allocation1 [shape = 'u32[144,128]{1,0:T(1,128)}', space=vmem, size = 0x12000, scoped, tag = 'internal scratch']
  %s0 = inlined_call_operand.hbm [shape: f32[16,128], index: 0, kind: input, shape index: {}]
  %s1 = inlined_call_operand.hbm [shape: f32[128,128], index: 1, kind: input, shape index: {}]
  %s2 = inlined_call_operand.hbm [shape: f32[16,128], index: 2, kind: output, shape index: {0}]
  %s3 = inlined_call_operand.hbm [shape: f32[16,128], index: 3, kind: output, shape index: {1}]
  %4 = xla_tuple %s2, %s3
  %s5 = sld [smem:[#allocation0]]
  $region57: #{tpu_custom_call.1} parent=0
    _
  %s7 = ssub.s32 1, %s5
  %s8 = scalar_select 0, %s7, %s5
  $region1: #{tpu_custom_call.1} parent=0
    #allocation2 [shape = 'u8[8192]{0}', space=vmem, size = 0x2000, scoped, tag = 'input window, operand 0']
    #allocation3 [shape = 's32[2]{0}', space=sflag, size = 0x8, scoped, tag = 'scoped memory for tpu_custom_call.1']
    #allocation4 [shape = 's32[2]{0}', space=sflag, size = 0x8, scoped, tag = 'scoped memory for tpu_custom_call.1']
    #allocation5 [shape = 'u8[65536]{0}', space=vmem, size = 0x10000, scoped, tag = 'input window, operand 1, single buffered']
    #allocation6 [shape = 's32[1]{0}', space=sflag, size = 0x4, scoped, tag = 'scoped memory for tpu_custom_call.1']
    #allocation7 [shape = 'u8[8192]{0}', space=vmem, size = 0x2000, scoped, tag = 'output window, operand 0']
    #allocation8 [shape = 'u8[8192]{0}', space=vmem, size = 0x2000, scoped, tag = 'output window, operand 1']
    #allocation9 [shape = 's32[2]{0}', space=sflag, size = 0x8, scoped, tag = 'scoped memory for tpu_custom_call.1']
    %9 = vsyncpa [#allocation3], 0
    %s10 = scalar_lea.sflag [#allocation3], 1
    %11 = vsyncpa %s10, 0
    %12 = vsyncpa [#allocation6], 0
    %13 = vsyncpa [#allocation4], 0
    %s14 = scalar_lea.sflag [#allocation4], 1
    %15 = vsyncpa %s14, 0
    %16 = vsyncpa [#allocation9], 0
    %s17 = scalar_lea.sflag [#allocation9], 1
    %18 = vsyncpa %s17, 0
    loop: start=0, step=1, limit=4
    $region2: #{tpu_custom_call.1} parent=1 // loop_pre_header
      _
    $region3: #{tpu_custom_call.1} parent=1 // loop_header
      %s20 = sphi 0, %s24
      %p21 = scmp.ge.s32.totalorder %s20, 4
      %s30 = sphi 0, %s32
      %s33 = sphi 0, %s30
      %s34 = sphi 0, %s33
      %s50 = sphi 0, %s34
      %s54 = sphi 0, %s54
      %s56 = sphi 0, %s54
      %s57 = sphi 0, %s56
      %s71 = sphi 0, %s57
      %s77 = sphi 0, %s79
      %s80 = sphi 0, %s77
      %s81 = sphi 0, %s80
      %s97 = sphi 0, %s81
      %s103 = sphi 0, %s105
      %s106 = sphi 0, %s103
      %s107 = sphi 0, %s106
      %s123 = sphi 0, %s107
    $region4: #{tpu_custom_call.1} parent=1 // loop_header_branch
      %23 = sbr.rel (%p21) target = $region8
    $region5: #{tpu_custom_call.1} parent=1 // loop_body
      %s25 = ssub.s32 %s20, 1
      %s26 = ssub.s32 %s20, 2
      %s27 = sadd.s32 %s20, 1
      %s28 = ssub.s32 %s20, %s27
      %p29 = scmp.eq.s32.totalorder %s28, 0
      %s31 = sadd.s32 %s30, 1
      %s32 = scalar_select %p29, %s30, %s31
      %p35 = pneg %p29
      %p36 = scmp.eq.s32.totalorder %s20, 1
      %p37 = por %p35, %p36
      %p38 = scmp.ne.s32.totalorder %s30, %s33
      %p39 = scmp.eq.s32.totalorder %s20, 0
      %p40 = por %p38, %p39
      %p41 = scmp.ne.s32.totalorder %s30, %s33
      %p42 = scmp.eq.s32.totalorder %s25, 1
      %p43 = por %p41, %p42
      %p44 = scmp.ne.s32.totalorder %s33, %s34
      %p45 = scmp.eq.s32.totalorder %s25, 0
      %p46 = por %p44, %p45
      %p47 = scmp.ne.s32.totalorder %s33, %s34
      %p48 = scmp.eq.s32.totalorder %s26, 1
      %p49 = por %p47, %p48
      %p51 = scmp.ne.s32.totalorder %s34, %s50
      %p52 = scmp.eq.s32.totalorder %s26, 0
      %p53 = por %p51, %p52
      %s55 = sadd.s32 %s54, 1
      %p58 = scmp.eq.s32.totalorder %s20, 1
      %p59 = scmp.ne.s32.totalorder %s54, %s56
      %p60 = scmp.eq.s32.totalorder %s20, 0
      %p61 = por %p59, %p60
      %p62 = scmp.ne.s32.totalorder %s54, %s56
      %p63 = scmp.eq.s32.totalorder %s25, 1
      %p64 = por %p62, %p63
      %p65 = scmp.ne.s32.totalorder %s56, %s57
      %p66 = scmp.eq.s32.totalorder %s25, 0
      %p67 = por %p65, %p66
      %p68 = scmp.ne.s32.totalorder %s56, %s57
      %p69 = scmp.eq.s32.totalorder %s26, 1
      %p70 = por %p68, %p69
      %p72 = scmp.ne.s32.totalorder %s57, %s71
      %p73 = scmp.eq.s32.totalorder %s26, 0
      %p74 = por %p72, %p73
      %s75 = ssub.s32 %s20, %s27
      %p76 = scmp.eq.s32.totalorder %s75, 0
      %s78 = sadd.s32 %s77, 1
      %s79 = scalar_select %p76, %s77, %s78
      %p82 = pneg %p76
      %p83 = scmp.eq.s32.totalorder %s20, 1
      %p84 = por %p82, %p83
      %p85 = scmp.ne.s32.totalorder %s77, %s80
      %p86 = scmp.eq.s32.totalorder %s20, 0
      %p87 = por %p85, %p86
      %p88 = scmp.ne.s32.totalorder %s77, %s80
      %p89 = scmp.eq.s32.totalorder %s25, 1
      %p90 = por %p88, %p89
      %p91 = scmp.ne.s32.totalorder %s80, %s81
      %p92 = scmp.eq.s32.totalorder %s25, 0
      %p93 = por %p91, %p92
      %p94 = scmp.ne.s32.totalorder %s80, %s81
      %p95 = scmp.eq.s32.totalorder %s26, 1
      %p96 = por %p94, %p95
      %p98 = scmp.ne.s32.totalorder %s81, %s97
      %p99 = scmp.eq.s32.totalorder %s26, 0
      %p100 = por %p98, %p99
      %s101 = ssub.s32 %s20, %s27
      %p102 = scmp.eq.s32.totalorder %s101, 0
      %s104 = sadd.s32 %s103, 1
      %s105 = scalar_select %p102, %s103, %s104
      %p108 = pneg %p102
      %p109 = scmp.eq.s32.totalorder %s20, 1
      %p110 = por %p108, %p109
      %p111 = scmp.ne.s32.totalorder %s103, %s106
      %p112 = scmp.eq.s32.totalorder %s20, 0
      %p113 = por %p111, %p112
      %p114 = scmp.ne.s32.totalorder %s103, %s106
      %p115 = scmp.eq.s32.totalorder %s25, 1
      %p116 = por %p114, %p115
      %p117 = scmp.ne.s32.totalorder %s106, %s107
      %p118 = scmp.eq.s32.totalorder %s25, 0
      %p119 = por %p117, %p118
      %p120 = scmp.ne.s32.totalorder %s106, %s107
      %p121 = scmp.eq.s32.totalorder %s26, 1
      %p122 = por %p120, %p121
      %p124 = scmp.ne.s32.totalorder %s107, %s123
      %p125 = scmp.eq.s32.totalorder %s26, 0
      %p126 = por %p124, %p125
      %p127 = scmp.le.s32.totalorder 1, %s20
      %p128 = scmp.lt.s32.totalorder %s20, 3
      %p129 = pnand %p127, %p128
      %p130 = pneg %p129
      // Predicated region
      $region9: #{tpu_custom_call.1} parent=5 // pred_check
        _
      $region10: #{tpu_custom_call.1} parent=5 // pred_check_branch
        %132 = sbr.rel (%p129) target = $region12
      $region11: #{tpu_custom_call.1} parent=5 // pred_region
        %s133 = ssub.s32 %s20, 1
        // Predicated region
        $region13: #{tpu_custom_call.1} parent=11 // pred_check
          %p134 = pneg %p67
        $region14: #{tpu_custom_call.1} parent=11 // pred_check_branch
          %136 = sbr.rel (%p134) target = $region16
        $region15: #{tpu_custom_call.1} parent=11 // pred_region
          %s138 = ssub.s32 2048, 2048
          %139 = vsyncadd [#allocation6], %s138
          %s140 = sshll.u32 [#allocation5], 4
          %s141 = int_to_ptr.vmem [resolvable:$true] %s140
          %146 = dma.hbm_to_vmem [thread:$0]  %s1, 2048, %s141, [#allocation6], 128, 128, 8
        $region16: #{tpu_custom_call.1} parent=11 // pred_fallthru
          _
      $region12: #{tpu_custom_call.1} parent=5 // pred_fallthru
        _
      %p147 = scmp.lt.s32.totalorder %s20, 2
      // Predicated region
      $region17: #{tpu_custom_call.1} parent=5 // pred_check
        %p148 = pneg %p147
      $region18: #{tpu_custom_call.1} parent=5 // pred_check_branch
        %150 = sbr.rel (%p148) target = $region20
      $region19: #{tpu_custom_call.1} parent=5 // pred_region
        // Predicated region
        $region21: #{tpu_custom_call.1} parent=19 // pred_check
          %p151 = pneg %p40
        $region22: #{tpu_custom_call.1} parent=19 // pred_check_branch
          %153 = sbr.rel (%p151) target = $region24
        $region23: #{tpu_custom_call.1} parent=19 // pred_region
          %s154 = sand.u32 %s30, 1
          %s155 = scalar_lea.sflag [#allocation3], %s154
          %s156 = sand.u32 %s30, 1
          %s157 = smul.addr %s156, 8
          %s158 = scalar_lea.vmem [#allocation2], %s157
          %s160 = ssub.s32 128, 128
          %161 = vsyncadd %s155, %s160
          %s162 = smul.addr %s20, 128
          %s163 = scalar_lea.hbm %s0, %s162
          %s165 = sshll.u32 %s158, 4
          %s166 = int_to_ptr.vmem [resolvable:$true] %s165
          %168 = dma.hbm_to_vmem [thread:$0]  %s163, 128, %s166, %s155
        $region24: #{tpu_custom_call.1} parent=19 // pred_fallthru
          _
      $region20: #{tpu_custom_call.1} parent=5 // pred_fallthru
        _
      %p169 = scmp.le.s32.totalorder 1, %s20
      %p170 = scmp.lt.s32.totalorder %s20, 3
      %p171 = pnand %p169, %p170
      %p172 = pneg %p171
      // Predicated region
      $region25: #{tpu_custom_call.1} parent=5 // pred_check
        _
      $region26: #{tpu_custom_call.1} parent=5 // pred_check_branch
        %174 = sbr.rel (%p171) target = $region28
      $region27: #{tpu_custom_call.1} parent=5 // pred_region
        %s175 = ssub.s32 %s20, 1
        %s176 = sand.u32 %s33, 1
        %s177 = scalar_lea.sflag [#allocation3], %s176
        %s178 = sand.u32 %s33, 1
        %s179 = smul.addr %s178, 8
        %s180 = scalar_lea.vmem [#allocation2], %s179
        // Predicated region
        $region29: #{tpu_custom_call.1} parent=27 // pred_check
          %p181 = pneg %p46
        $region30: #{tpu_custom_call.1} parent=27 // pred_check_branch
          %183 = sbr.rel (%p181) target = $region32
        $region31: #{tpu_custom_call.1} parent=27 // pred_region
          %184 = dma.done %s177, 128
        $region32: #{tpu_custom_call.1} parent=27 // pred_fallthru
          _
        // Predicated region
        $region33: #{tpu_custom_call.1} parent=27 // pred_check
          %p185 = pneg %p67
        $region34: #{tpu_custom_call.1} parent=27 // pred_check_branch
          %187 = sbr.rel (%p185) target = $region36
        $region35: #{tpu_custom_call.1} parent=27 // pred_region
          %188 = dma.done [#allocation6], 2048
        $region36: #{tpu_custom_call.1} parent=27 // pred_fallthru
          _
        %s189 = sand.u32 %s33, 1
        %s190 = scalar_lea.sflag [#allocation3], %s189
        %s191 = sand.u32 %s33, 1
        %s192 = smul.addr %s191, 8
        %s193 = scalar_lea.vmem [#allocation2], %s192
        %p194 = pneg %p46
        %p195 = pneg %p43
        %p196 = pneg %p67
        %p197 = pneg %p64
        %p198 = pneg %p93
        %p199 = pneg %p90
        %s200 = sand.u32 %s80, 1
        %s201 = scalar_lea.sflag [#allocation4], %s200
        %s202 = sand.u32 %s80, 1
        %s203 = smul.addr %s202, 8
        %s204 = scalar_lea.vmem [#allocation7], %s203
        %p205 = pneg %p119
        %p206 = pneg %p116
        %s207 = sand.u32 %s106, 1
        %s208 = scalar_lea.sflag [#allocation9], %s207
        %s209 = sand.u32 %s106, 1
        %s210 = smul.addr %s209, 8
        %s211 = scalar_lea.vmem [#allocation8], %s210
        %v212 = vld [vmem:[%s180] sm:$0xff]
        %v213 = vld [vmem:[#allocation5] sm:$0xff]
        %v214 = vld [vmem:[#allocation5 + $0x8] sm:$0xff]
        %v215 = vld [vmem:[#allocation5 + $0x10] sm:$0xff]
        %v216 = vld [vmem:[#allocation5 + $0x18] sm:$0xff]
        %v217 = vld [vmem:[#allocation5 + $0x20] sm:$0xff]
        %v218 = vld [vmem:[#allocation5 + $0x28] sm:$0xff]
        %v219 = vld [vmem:[#allocation5 + $0x30] sm:$0xff]
        %v220 = vld [vmem:[#allocation5 + $0x38] sm:$0xff]
        %v221 = vld [vmem:[#allocation5 + $0x40] sm:$0xff]
        %v222 = vld [vmem:[#allocation5 + $0x48] sm:$0xff]
        %v223 = vld [vmem:[#allocation5 + $0x50] sm:$0xff]
        %v224 = vld [vmem:[#allocation5 + $0x58] sm:$0xff]
        %v225 = vld [vmem:[#allocation5 + $0x60] sm:$0xff]
        %v226 = vld [vmem:[#allocation5 + $0x68] sm:$0xff]
        %v227 = vld [vmem:[#allocation5 + $0x70] sm:$0xff]
        %v228 = vld [vmem:[#allocation5 + $0x78] sm:$0xff]
        %229 = vmatprep.subr.mxu0 0.0
        %230 = vmatpush1.msra.mxu0 %v228
        %231 = vmatprep.subr.mxu0 0.0
        %232 = vmatpush1.msra.mxu0 %v227
        %233 = vmatprep.subr.mxu0 0.0
        %234 = vmatpush1.msra.mxu0 %v226
        %235 = vmatprep.subr.mxu0 0.0
        %236 = vmatpush1.msra.mxu0 %v225
        %237 = vmatprep.subr.mxu0 0.0
        %238 = vmatpush1.msra.mxu0 %v224
        %239 = vmatprep.subr.mxu0 0.0
        %240 = vmatpush1.msra.mxu0 %v223
        %241 = vmatprep.subr.mxu0 0.0
        %242 = vmatpush1.msra.mxu0 %v222
        %243 = vmatprep.subr.mxu0 0.0
        %244 = vmatpush1.msra.mxu0 %v221
        %245 = vmatprep.subr.mxu0 0.0
        %246 = vmatpush1.msra.mxu0 %v220
        %247 = vmatprep.subr.mxu0 0.0
        %248 = vmatpush1.msra.mxu0 %v219
        %249 = vmatprep.subr.mxu0 0.0
        %250 = vmatpush1.msra.mxu0 %v218
        %251 = vmatprep.subr.mxu0 0.0
        %252 = vmatpush1.msra.mxu0 %v217
        %253 = vmatprep.subr.mxu0 0.0
        %254 = vmatpush1.msra.mxu0 %v216
        %255 = vmatprep.subr.mxu0 0.0
        %256 = vmatpush1.msra.mxu0 %v215
        %257 = vmatprep.subr.mxu0 0.0
        %258 = vmatpush1.msra.mxu0 %v214
        %259 = vmatprep.subr.mxu0 0.0
        %260 = vmatpush1.msra.mxu0 %v213
        %261 = vmatprep.subr.mxu0 0.0
        %262 = vmatpush2.msra.mxu0 0.0
        %263 = vmatprep.subr.mxu0 0.0
        %264 = vmatpush2.msra.mxu0 0.0
        %265 = vmatprep.subr.mxu0 0.0
        %266 = vmatpush2.msra.mxu0 0.0
        %267 = vmatprep.subr.mxu0 0.0
        %268 = vmatpush2.msra.mxu0 0.0
        %269 = vmatprep.subr.mxu0 0.0
        %270 = vmatpush2.msra.mxu0 0.0
        %271 = vmatprep.subr.mxu0 0.0
        %272 = vmatpush2.msra.mxu0 0.0
        %273 = vmatprep.subr.mxu0 0.0
        %274 = vmatpush2.msra.mxu0 0.0
        %275 = vmatprep.subr.mxu0 0.0
        %276 = vmatpush2.msra.mxu0 0.0
        %277 = vmatprep.subr.mxu0 0.0
        %278 = vmatpush2.msra.mxu0 0.0
        %279 = vmatprep.subr.mxu0 0.0
        %280 = vmatpush2.msra.mxu0 0.0
        %281 = vmatprep.subr.mxu0 0.0
        %282 = vmatpush2.msra.mxu0 0.0
        %283 = vmatprep.subr.mxu0 0.0
        %284 = vmatpush2.msra.mxu0 0.0
        %285 = vmatprep.subr.mxu0 0.0
        %286 = vmatpush2.msra.mxu0 0.0
        %287 = vmatprep.subr.mxu0 0.0
        %288 = vmatpush2.msra.mxu0 0.0
        %289 = vmatprep.subr.mxu0 0.0
        %290 = vmatpush2.msra.mxu0 0.0
        %291 = vmatprep.subr.mxu0 0.0
        %292 = vmatpush2.msra.mxu0 0.0
        %293 = vmatprep.mubr.f32.mxu0 0.0
        %294 = vmatmul.mubr.f32.gmra.mxu0 %v212
        %v295 = vpop.f32.mrf.mxu0
        %v296 = vadd.f32 0.0, %v295
        %v297 = vpop.f32.mrf.mxu0
        %298 = vdwg.mxu0
        %v299 = vmul.f32 %v296, 0.2
        %300 = vst [vmem:[%s211] sm:$0xff] %v299
        %v301 = vsub.f32 %v212, %v299
        %302 = vst [vmem:[%s204] sm:$0xff] %v301
        %s303 = sand.u32 %s80, 1
        %s304 = scalar_lea.sflag [#allocation4], %s303
        %s305 = sand.u32 %s80, 1
        %s306 = smul.addr %s305, 8
        %s307 = scalar_lea.vmem [#allocation7], %s306
        %s308 = sand.u32 %s106, 1
        %s309 = scalar_lea.sflag [#allocation9], %s308
        %s310 = sand.u32 %s106, 1
        %s311 = smul.addr %s310, 8
        %s312 = scalar_lea.vmem [#allocation8], %s311
        // Predicated region
        $region37: #{tpu_custom_call.1} parent=27 // pred_check
          %p313 = pneg %p90
        $region38: #{tpu_custom_call.1} parent=27 // pred_check_branch
          %315 = sbr.rel (%p313) target = $region40
        $region39: #{tpu_custom_call.1} parent=27 // pred_region
          %s317 = ssub.s32 128, 128
          %318 = vsyncadd %s304, %s317
          %s319 = smul.addr %s25, 128
          %s320 = scalar_lea.hbm %s2, %s319
          %s322 = sshll.u32 %s307, 4
          %s323 = int_to_ptr.vmem [resolvable:$true] %s322
          %325 = dma.vmem_to_hbm [thread:$0]  %s323, 128, %s320, %s304
        $region40: #{tpu_custom_call.1} parent=27 // pred_fallthru
          _
        // Predicated region
        $region41: #{tpu_custom_call.1} parent=27 // pred_check
          %p326 = pneg %p116
        $region42: #{tpu_custom_call.1} parent=27 // pred_check_branch
          %328 = sbr.rel (%p326) target = $region44
        $region43: #{tpu_custom_call.1} parent=27 // pred_region
          %s330 = ssub.s32 128, 128
          %331 = vsyncadd %s309, %s330
          %s332 = smul.addr %s25, 128
          %s333 = scalar_lea.hbm %s3, %s332
          %s335 = sshll.u32 %s312, 4
          %s336 = int_to_ptr.vmem [resolvable:$true] %s335
          %338 = dma.vmem_to_hbm [thread:$0]  %s336, 128, %s333, %s309
        $region44: #{tpu_custom_call.1} parent=27 // pred_fallthru
          _
      $region28: #{tpu_custom_call.1} parent=5 // pred_fallthru
        _
      %p339 = scmp.le.s32.totalorder 2, %s20
      // Predicated region
      $region45: #{tpu_custom_call.1} parent=5 // pred_check
        %p340 = pneg %p339
      $region46: #{tpu_custom_call.1} parent=5 // pred_check_branch
        %342 = sbr.rel (%p340) target = $region48
      $region47: #{tpu_custom_call.1} parent=5 // pred_region
        %s343 = ssub.s32 %s20, 2
        // Predicated region
        $region49: #{tpu_custom_call.1} parent=47 // pred_check
          %p344 = pneg %p96
        $region50: #{tpu_custom_call.1} parent=47 // pred_check_branch
          %346 = sbr.rel (%p344) target = $region52
        $region51: #{tpu_custom_call.1} parent=47 // pred_region
          %s347 = sand.u32 %s81, 1
          %s348 = scalar_lea.sflag [#allocation4], %s347
          %s349 = sand.u32 %s81, 1
          %s350 = smul.addr %s349, 8
          %s351 = scalar_lea.vmem [#allocation7], %s350
          %352 = dma.done %s348, 128
        $region52: #{tpu_custom_call.1} parent=47 // pred_fallthru
          _
        // Predicated region
        $region53: #{tpu_custom_call.1} parent=47 // pred_check
          %p353 = pneg %p122
        $region54: #{tpu_custom_call.1} parent=47 // pred_check_branch
          %355 = sbr.rel (%p353) target = $region56
        $region55: #{tpu_custom_call.1} parent=47 // pred_region
          %s356 = sand.u32 %s107, 1
          %s357 = scalar_lea.sflag [#allocation9], %s356
          %s358 = sand.u32 %s107, 1
          %s359 = smul.addr %s358, 8
          %s360 = scalar_lea.vmem [#allocation8], %s359
          %361 = dma.done %s357, 128
        $region56: #{tpu_custom_call.1} parent=47 // pred_fallthru
          _
      $region48: #{tpu_custom_call.1} parent=5 // pred_fallthru
        _
    $region6: #{tpu_custom_call.1} parent=1 // loop_footer
      %s24 = sadd.s32 1, %s20
    $region7: #{tpu_custom_call.1} parent=1 // loop_footer_branch
      %19 = sbr.rel target = $region3
    $region8: #{tpu_custom_call.1} parent=1 // loop_exit
      _
    %362 = vsyncpa [#allocation3], 1
    %s363 = scalar_lea.sflag [#allocation3], 1
    %364 = vsyncpa %s363, 1
    %365 = vsyncpa [#allocation6], 1
    %366 = vsyncpa [#allocation4], 1
    %s367 = scalar_lea.sflag [#allocation4], 1
    %368 = vsyncpa %s367, 1
    %369 = vsyncpa [#allocation9], 1
    %s370 = scalar_lea.sflag [#allocation9], 1
    %371 = vsyncpa %s370, 1

</llo_original>
